<compile_context>
chip_gen: v7x
topology: tpu7x:2x2x1
jax: 0.10.0
libtpu: 0.0.40
codegen_flags: <defaults>
</compile_context>

<pallas_src>
import functools

import jax
import jax.numpy as jnp
from jax.experimental import pallas as pl
from jax.experimental.pallas import tpu as pltpu


def _conv1x1_bn_relu_kernel(x_ref, w_ref, bias_ref, o_ref, *, nb, compute_dtype):
    # x_ref: (nb, Cin, tile_hw)   w_ref: (tile_cout, Cin)  [BN scale pre-folded]
    # bias_ref: (tile_cout, 1)    o_ref: (nb, tile_cout, tile_hw)
    w = w_ref[...]
    b = bias_ref[...]
    for i in range(nb):                      # static, fully unrolled
        x = x_ref[i]
        if compute_dtype is not None and x.dtype != compute_dtype:
            x = x.astype(compute_dtype)      # in-kernel cast: no extra HBM pass
        y = jnp.dot(w, x, preferred_element_type=jnp.float32)
        y = y + b                            # folded BatchNorm bias (f32)
        o_ref[i] = jnp.maximum(y, 0.0).astype(o_ref.dtype)   # ReLU


def _pick_tiles(N, HW, Cin, Cout, x_bytes, o_bytes, w_bytes):
    """Pick (Nb, tile_cout, tile_hw) that fit the double-buffered working set."""
    try:
        vmem = int(pltpu.get_tpu_info().vmem_capacity_bytes)
    except Exception:
        vmem = 64 * 1024 * 1024                      # conservative fallback
    vmem = min(vmem, 128 * 1024 * 1024)              # guard over-reported capacity
    budget = vmem // 2                               # headroom for compiler scratch

    # --- Cout tiling: keep the (folded) weight resident but bounded. ---
    def w_resident(tc):
        return 2 * (tc * Cin * w_bytes + tc * 4)     # dbl-buffered weight + bias
    if w_resident(Cout) <= budget // 4:
        tile_cout = Cout
    else:
        tc = (budget // 4) // max(2 * (Cin * w_bytes + 4), 1)
        tile_cout = max(8, (tc // 8) * 8)
        # TODO(synk): if even tile_cout=8 overflows VMEM (huge Cin), split Cin
        # with an 'arbitrary' reduction axis + f32 VMEM accumulator.

    resident = w_resident(tile_cout)
    col_budget = max(budget - resident, 0)
    per_col = 2 * (Cin * x_bytes + tile_cout * o_bytes)   # dbl-buffered x + out

    padded_hw = pl.cdiv(HW, 128) * 128
    if padded_hw <= 512:
        # Small spatial extent: single HW tile, batch Nb images per grid step.
        tile_hw = padded_hw
        nb = max(1, min(N, 8, 2048 // padded_hw,
                        col_budget // max(per_col * padded_hw, 1)))
    else:
        nb = 1
        t = col_budget // max(per_col, 1)
        t = int(max(128, min(t, 8192)))
        t = (t // 128) * 128
        tile_hw = int(min(t, padded_hw))
    return int(nb), int(tile_cout), int(tile_hw), int(vmem)


def conv1x1_bn_relu(x_nchw, conv_w, bn_weight, bn_bias, bn_mean, bn_var,
                    *, stride=1, eps=1e-5, compute_dtype=None, out_dtype=None):
    """x_nchw: (N, Cin, H, W); conv_w: (Cout, Cin, 1, 1) (PyTorch layout).

    compute_dtype: optional matmul-operand dtype (e.g. jnp.bfloat16); the
      activation is cast inside the kernel, accumulation + BN/ReLU stay f32.
    out_dtype: optional output dtype (e.g. jnp.bfloat16) to halve writeback.
    """
    if stride != 1:
        # 1x1 conv with stride s == channel matmul on spatially-subsampled input.
        # TODO(synk): this materializes a strided-slice copy in HBM; fold the
        # stride into the kernel's index map if strided 1x1 layers are hot.
        x_nchw = x_nchw[:, :, ::stride, ::stride]
    # TODO(synk): groups > 1 (grouped 1x1 conv) not implemented; groups=1 only.

    N, Cin, H, W = x_nchw.shape
    Cout = conv_w.shape[0]
    HW = H * W
    out_dtype = out_dtype if out_dtype is not None else x_nchw.dtype
    matmul_dtype = compute_dtype if compute_dtype is not None else x_nchw.dtype

    # Free reshape (no transpose, no data movement); activation stays un-cast.
    x3 = x_nchw.reshape(N, Cin, HW)

    # Fold inference-mode BatchNorm: scale into the weight, bias kept separate.
    inv_std = jax.lax.rsqrt(bn_var.astype(jnp.float32) + eps)
    scale = bn_weight.astype(jnp.float32) * inv_std                      # (Cout,)
    w_folded = (conv_w.reshape(Cout, Cin).astype(jnp.float32)
                * scale[:, None]).astype(matmul_dtype)                   # (Cout, Cin)
    bias = (bn_bias.astype(jnp.float32)
            - bn_mean.astype(jnp.float32) * scale).reshape(Cout, 1)      # f32

    x_bytes = jnp.dtype(x3.dtype).itemsize
    w_bytes = jnp.dtype(w_folded.dtype).itemsize
    o_bytes = jnp.dtype(out_dtype).itemsize
    nb, tile_cout, tile_hw, vmem_bytes = _pick_tiles(
        N, HW, Cin, Cout, x_bytes, o_bytes, w_bytes)

    grid = (pl.cdiv(N, nb), pl.cdiv(Cout, tile_cout), pl.cdiv(HW, tile_hw))

    cost = pl.CostEstimate(
        flops=2 * N * HW * Cin * Cout,
        transcendentals=0,
        bytes_accessed=(N * Cin * HW * x_bytes
                        + Cout * Cin * w_bytes
                        + Cout * 4
                        + N * Cout * HW * o_bytes),
    )

    kernel = functools.partial(_conv1x1_bn_relu_kernel,
                               nb=nb, compute_dtype=compute_dtype)

    out = pl.pallas_call(
        kernel,
        out_shape=jax.ShapeDtypeStruct((N, Cout, HW), out_dtype),
        grid_spec=pltpu.PrefetchScalarGridSpec(
            num_scalar_prefetch=0,
            grid=grid,
            in_specs=[
                pl.BlockSpec((nb, Cin, tile_hw), lambda n, c, j: (n, 0, j)),
                pl.BlockSpec((tile_cout, Cin), lambda n, c, j: (c, 0)),   # resident W
                pl.BlockSpec((tile_cout, 1), lambda n, c, j: (c, 0)),
            ],
            out_specs=pl.BlockSpec((nb, tile_cout, tile_hw),
                                   lambda n, c, j: (n, c, j)),
        ),
        compiler_params=pltpu.CompilerParams(
            dimension_semantics=("parallel", "parallel", "parallel"),
            vmem_limit_bytes=int(vmem_bytes * 3 // 4),
        ),
        cost_estimate=cost,
    )(x3, w_folded, bias)

    return out.reshape(N, Cout, H, W)


def _reference(x, conv_w, bn_weight, bn_bias, bn_mean, bn_var, eps=1e-5):
    Cout, Cin = conv_w.shape[0], conv_w.shape[1]
    w_mat = jnp.transpose(conv_w.reshape(Cout, Cin), (1, 0))
    ref = jnp.einsum('nchw,co->nohw', x, w_mat)
    ref = (ref - bn_mean.reshape(1, Cout, 1, 1)) / jnp.sqrt(
        bn_var.reshape(1, Cout, 1, 1) + eps)
    ref = ref * bn_weight.reshape(1, Cout, 1, 1) + bn_bias.reshape(1, Cout, 1, 1)
    return jnp.maximum(ref, 0.0)


if __name__ == "__main__":
    key = jax.random.PRNGKey(0)
    k_x, k_w = jax.random.split(key)

    N, Cin, H, W = 2, 4, 16, 16
    Cout = 8

    x = jax.random.normal(k_x, (N, Cin, H, W), dtype=jnp.float32)
    # Conv2d(in, out, 1, bias=False) weight: (Cout, Cin, 1, 1)
    conv_w = jax.random.normal(k_w, (Cout, Cin, 1, 1), dtype=jnp.float32) * 0.1

    # BatchNorm(out_channels) with weight_init=1.0, bias_init=0.0 and fresh
    # running stats (mean=0, var=1), eps=1e-5 — inference-mode semantics.
    bn_weight = jnp.ones((Cout,), jnp.float32)
    bn_bias = jnp.zeros((Cout,), jnp.float32)
    bn_mean = jnp.zeros((Cout,), jnp.float32)
    bn_var = jnp.ones((Cout,), jnp.float32)

    ref = _reference(x, conv_w, bn_weight, bn_bias, bn_mean, bn_var)

    # f32 path (tight check).
    y = conv1x1_bn_relu(x, conv_w, bn_weight, bn_bias, bn_mean, bn_var,
                        stride=1, eps=1e-5)
    jax.block_until_ready(y)
    assert y.shape == (N, Cout, H, W)
    assert jnp.allclose(y, ref, atol=1e-5, rtol=1e-5)

    # bf16 operand path (in-kernel cast, no extra HBM pass) + bf16 output
    # (halved writeback); accumulation and epilogue stay f32.
    y_bf16 = conv1x1_bn_relu(x, conv_w, bn_weight, bn_bias, bn_mean, bn_var,
                             stride=1, eps=1e-5,
                             compute_dtype=jnp.bfloat16, out_dtype=jnp.bfloat16)
    jax.block_until_ready(y_bf16)
    assert y_bf16.shape == (N, Cout, H, W)
    assert jnp.allclose(y_bf16.astype(jnp.float32), ref, atol=2e-2, rtol=2e-2)

    print("KERNEL_OK")
</pallas_src>

<mosaic_0001>
module attributes {stable_mosaic.version = 11 : i64} {
  func.func @_conv1x1_bn_relu_kernel(%arg0: i32, %arg1: i32, %arg2: i32, %arg3: memref<2x4x256xf32, #tpu.memory_space<vmem>>, %arg4: memref<8x4xf32, #tpu.memory_space<vmem>>, %arg5: memref<8x1xf32, #tpu.memory_space<vmem>>, %arg6: memref<2x8x256xf32, #tpu.memory_space<vmem>>) attributes {dimension_semantics = [#tpu.dimension_semantics<parallel>, #tpu.dimension_semantics<parallel>, #tpu.dimension_semantics<parallel>], iteration_bounds = array<i64: 1, 1, 1>, scalar_prefetch = 0 : i64, scratch_operands = 0 : i64, tpu.core_type = #tpu.core_type<tc>, window_params = [{transform_indices = @transform_0, window_bounds = array<i64: 2, 4, 256>}, {transform_indices = @transform_1, window_bounds = array<i64: 8, 4>}, {transform_indices = @transform_2, window_bounds = array<i64: 8, 1>}, {transform_indices = @transform_3, window_bounds = array<i64: 2, 8, 256>}]} {
    %c0 = arith.constant 0 : index
    %c0_0 = arith.constant 0 : index
    %0 = vector.load %arg4[%c0, %c0_0] : memref<8x4xf32, #tpu.memory_space<vmem>>, vector<8x4xf32>
    %c0_1 = arith.constant 0 : index
    %c0_2 = arith.constant 0 : index
    %1 = vector.load %arg5[%c0_1, %c0_2] : memref<8x1xf32, #tpu.memory_space<vmem>>, vector<8x1xf32>
    %c0_3 = arith.constant 0 : index
    %c0_4 = arith.constant 0 : index
    %c0_5 = arith.constant 0 : index
    %2 = vector.load %arg3[%c0_3, %c0_4, %c0_5] : memref<2x4x256xf32, #tpu.memory_space<vmem>>, vector<1x4x256xf32>
    %3 = vector.shape_cast %2 : vector<1x4x256xf32> to vector<4x256xf32>
    %cst = arith.constant dense<0.000000e+00> : vector<8x256xf32>
    %4 = tpu.matmul %0, %3, %cst {dimension_numbers = #tpu.dot_dimension_numbers<[1], [0], [0], [1], [0, 0, 1, 1], [], []>} : vector<8x4xf32>, vector<4x256xf32>, vector<8x256xf32> -> vector<8x256xf32>
    %5 = vector.broadcast %1 : vector<8x1xf32> to vector<8x256xf32>
    %6 = arith.addf %4, %5 : vector<8x256xf32>
    %cst_6 = arith.constant 0.000000e+00 : f32
    %7 = vector.broadcast %cst_6 : f32 to vector<8x256xf32>
    %8 = arith.maximumf %6, %7 : vector<8x256xf32>
    %c0_7 = arith.constant 0 : index
    %c0_8 = arith.constant 0 : index
    %c0_9 = arith.constant 0 : index
    %9 = vector.load %arg6[%c0_7, %c0_8, %c0_9] : memref<2x8x256xf32, #tpu.memory_space<vmem>>, vector<1x8x256xf32>
    %10 = vector.shape_cast %9 : vector<1x8x256xf32> to vector<8x256xf32>
    %11 = vector.shape_cast %8 : vector<8x256xf32> to vector<1x8x256xf32>
    tpu.vector_store %arg6[%c0_7, %c0_8, %c0_9], %11 {strides = array<i32>} : memref<2x8x256xf32, #tpu.memory_space<vmem>>, vector<1x8x256xf32>,
    %c1 = arith.constant 1 : index
    %c0_10 = arith.constant 0 : index
    %c0_11 = arith.constant 0 : index
    %12 = vector.load %arg3[%c1, %c0_10, %c0_11] : memref<2x4x256xf32, #tpu.memory_space<vmem>>, vector<1x4x256xf32>
    %13 = vector.shape_cast %12 : vector<1x4x256xf32> to vector<4x256xf32>
    %cst_12 = arith.constant dense<0.000000e+00> : vector<8x256xf32>
    %14 = tpu.matmul %0, %13, %cst_12 {dimension_numbers = #tpu.dot_dimension_numbers<[1], [0], [0], [1], [0, 0, 1, 1], [], []>} : vector<8x4xf32>, vector<4x256xf32>, vector<8x256xf32> -> vector<8x256xf32>
    %15 = vector.broadcast %1 : vector<8x1xf32> to vector<8x256xf32>
    %16 = arith.addf %14, %15 : vector<8x256xf32>
    %cst_13 = arith.constant 0.000000e+00 : f32
    %17 = vector.broadcast %cst_13 : f32 to vector<8x256xf32>
    %18 = arith.maximumf %16, %17 : vector<8x256xf32>
    %c1_14 = arith.constant 1 : index
    %c0_15 = arith.constant 0 : index
    %c0_16 = arith.constant 0 : index
    %19 = vector.load %arg6[%c1_14, %c0_15, %c0_16] : memref<2x8x256xf32, #tpu.memory_space<vmem>>, vector<1x8x256xf32>
    %20 = vector.shape_cast %19 : vector<1x8x256xf32> to vector<8x256xf32>
    %21 = vector.shape_cast %18 : vector<8x256xf32> to vector<1x8x256xf32>
    tpu.vector_store %arg6[%c1_14, %c0_15, %c0_16], %21 {strides = array<i32>} : memref<2x8x256xf32, #tpu.memory_space<vmem>>, vector<1x8x256xf32>,
    return
  }
  func.func @transform_0(%arg0: i32, %arg1: i32, %arg2: i32) -> (i32, i32, i32) {
    %c0_i32 = arith.constant 0 : i32
    %c0_i32_0 = arith.constant 0 : i32
    return %arg0, %c0_i32, %arg2 : i32, i32, i32
  }
  func.func @transform_1(%arg0: i32, %arg1: i32, %arg2: i32) -> (i32, i32) {
    %c0_i32 = arith.constant 0 : i32
    %c0_i32_0 = arith.constant 0 : i32
    return %arg1, %c0_i32 : i32, i32
  }
  func.func @transform_2(%arg0: i32, %arg1: i32, %arg2: i32) -> (i32, i32) {
    %c0_i32 = arith.constant 0 : i32
    %c0_i32_0 = arith.constant 0 : i32
    return %arg1, %c0_i32 : i32, i32
  }
  func.func @transform_3(%arg0: i32, %arg1: i32, %arg2: i32) -> (i32, i32, i32) {
    %c0_i32 = arith.constant 0 : i32
    return %arg0, %arg1, %arg2 : i32, i32, i32
  }
}

</mosaic_0001>

<llo_original>
// kernel: tpu_custom_call.1
$region0: #{tpu_custom_call.1}
  #allocation0 [shape = 'u32[]', space=smem, size = 0x4, offset = 0x4, fixed_abs, tag = 'smem constant byte address 0x4 - core index']
  #allocation1 [shape = 'u32[144,128]{1,0:T(1,128)}', space=vmem, size = 0x12000, scoped, tag = 'internal scratch']
  %s0 = inlined_call_operand.vmem [shape: f32[2,4,256], index: 0, kind: input, shape index: {}]
  %s1 = inlined_call_operand.vmem [shape: f32[8,4], index: 1, kind: input, shape index: {}]
  %s2 = inlined_call_operand.vmem [shape: f32[8,1], index: 2, kind: input, shape index: {}]
  %s3 = inlined_call_operand.hbm [shape: f32[2,8,256], index: 3, kind: output, shape index: {}]
  %s4 = sld [smem:[#allocation0]]
  $region22: #{tpu_custom_call.1} parent=0
    _
  %s6 = ssub.s32 1, %s4
  %s7 = scalar_select 0, %s6, %s4
  $region1: #{tpu_custom_call.1} parent=0
    #allocation2 [shape = 'u8[16384]{0}', space=vmem, size = 0x4000, scoped, tag = 'output window, operand 0, single buffered']
    #allocation3 [shape = 's32[1]{0}', space=sflag, size = 0x4, scoped, tag = 'scoped memory for tpu_custom_call.1']
    %8 = vsyncpa [#allocation3], 0
    // Predicated region
    $region2: #{tpu_custom_call.1} parent=1 // pred_check
      _
    $region3: #{tpu_custom_call.1} parent=1 // pred_check_branch
      %10 = sbr.rel (0) target = $region5
    $region4: #{tpu_custom_call.1} parent=1 // pred_region
      _
    $region5: #{tpu_custom_call.1} parent=1 // pred_fallthru
      _
    // Predicated region
    $region6: #{tpu_custom_call.1} parent=1 // pred_check
      _
    $region7: #{tpu_custom_call.1} parent=1 // pred_check_branch
      %12 = sbr.rel (0) target = $region9
    $region8: #{tpu_custom_call.1} parent=1 // pred_region
      _
    $region9: #{tpu_custom_call.1} parent=1 // pred_fallthru
      _
    // Predicated region
    $region10: #{tpu_custom_call.1} parent=1 // pred_check
      _
    $region11: #{tpu_custom_call.1} parent=1 // pred_check_branch
      %14 = sbr.rel (0) target = $region13
    $region12: #{tpu_custom_call.1} parent=1 // pred_region
      _
    $region13: #{tpu_custom_call.1} parent=1 // pred_fallthru
      _
    %v15 = vld [vmem:[%s1] sm:$0xff]
    %v16 = vld [vmem:[%s2] sm:$0xff]
    %v17 = vld [vmem:[%s0] sm:$0xff]
    %19 = vset.pattern.permute.xlu0 0
    %20 = vperm.xlu0 %19, %v16
    %v21 = vpop.permute.xlu0 %20
    %v24 = vcombine.high %v17, %v17
    %vm25 = vcmask 31744
    %v27 = vsel %vm25, %v15, 0
    %vm29 = vcmask 1043456
    %v30 = vsel %vm29, %v17, 0
    %v32 = vsel %vm29, %v24, 0
    %34 = vmatprep.subr.mxu0 %v32
    %35 = vmatpush1.msra.mxu0 %v30
    %36 = vmatprep.subr.mxu0 0.0
    %37 = vmatpush1.msra.mxu0 0.0
    %38 = vmatprep.subr.mxu0 0.0
    %39 = vmatpush1.msra.mxu0 0.0
    %40 = vmatprep.subr.mxu0 0.0
    %41 = vmatpush1.msra.mxu0 0.0
    %42 = vmatprep.subr.mxu0 0.0
    %43 = vmatpush1.msra.mxu0 0.0
    %44 = vmatprep.subr.mxu0 0.0
    %45 = vmatpush1.msra.mxu0 0.0
    %46 = vmatprep.subr.mxu0 0.0
    %47 = vmatpush1.msra.mxu0 0.0
    %48 = vmatprep.subr.mxu0 0.0
    %49 = vmatpush1.msra.mxu0 0.0
    %50 = vmatprep.subr.mxu0 0.0
    %51 = vmatpush1.msra.mxu0 0.0
    %52 = vmatprep.subr.mxu0 0.0
    %53 = vmatpush1.msra.mxu0 0.0
    %54 = vmatprep.subr.mxu0 0.0
    %55 = vmatpush1.msra.mxu0 0.0
    %56 = vmatprep.subr.mxu0 0.0
    %57 = vmatpush1.msra.mxu0 0.0
    %58 = vmatprep.subr.mxu0 0.0
    %59 = vmatpush1.msra.mxu0 0.0
    %60 = vmatprep.subr.mxu0 0.0
    %61 = vmatpush1.msra.mxu0 0.0
    %62 = vmatprep.subr.mxu0 0.0
    %63 = vmatpush1.msra.mxu0 0.0
    %64 = vmatprep.subr.mxu0 0.0
    %65 = vmatpush1.msra.mxu0 0.0
    %66 = vmatprep.subr.mxu0 0.0
    %67 = vmatpush1.msra.mxu0 0.0
    %68 = vmatprep.subr.mxu0 0.0
    %69 = vmatpush1.msra.mxu0 0.0
    %70 = vmatprep.subr.mxu0 0.0
    %71 = vmatpush1.msra.mxu0 0.0
    %72 = vmatprep.subr.mxu0 0.0
    %73 = vmatpush1.msra.mxu0 0.0
    %74 = vmatprep.subr.mxu0 0.0
    %75 = vmatpush1.msra.mxu0 0.0
    %76 = vmatprep.subr.mxu0 0.0
    %77 = vmatpush1.msra.mxu0 0.0
    %78 = vmatprep.subr.mxu0 0.0
    %79 = vmatpush1.msra.mxu0 0.0
    %80 = vmatprep.subr.mxu0 0.0
    %81 = vmatpush1.msra.mxu0 0.0
    %82 = vmatprep.subr.mxu0 0.0
    %83 = vmatpush1.msra.mxu0 0.0
    %84 = vmatprep.subr.mxu0 0.0
    %85 = vmatpush1.msra.mxu0 0.0
    %86 = vmatprep.subr.mxu0 0.0
    %87 = vmatpush1.msra.mxu0 0.0
    %88 = vmatprep.subr.mxu0 0.0
    %89 = vmatpush1.msra.mxu0 0.0
    %90 = vmatprep.subr.mxu0 0.0
    %91 = vmatpush1.msra.mxu0 0.0
    %92 = vmatprep.subr.mxu0 0.0
    %93 = vmatpush1.msra.mxu0 0.0
    %94 = vmatprep.subr.mxu0 0.0
    %95 = vmatpush1.msra.mxu0 0.0
    %96 = vmatprep.subr.mxu0 0.0
    %97 = vmatpush1.msra.mxu0 0.0
    %98 = vmatprep.mubr.f32.mxu0 0.0
    %99 = vmatmul.mubr.f32.gmra.mrb[0].mxu0 %v27
    %v100 = vpop.f32.mrb[0].mxu0
    %v101 = vadd.f32 %v21, %v100
    %v102 = vpop.f32.mrb[0].mxu0
    %v103 = vadd.f32 %v21, %v102
    %104 = vdwg.mxu0
    %v105 = vmax.f32 %v101, 0.0
    %v106 = vmax.f32 %v103, 0.0
    %107 = vst [vmem:[#allocation2] sm:$0xff] %v105
    %108 = vst [vmem:[#allocation2 + $0x8] sm:$0xff] %v106
    %s109 = scalar_lea.vmem %s0, 8
    %v110 = vld [vmem:[%s109] sm:$0xff]
    %v112 = vcombine.high %v110, %v110
    %v113 = vsel %vm29, %v110, 0
    %v115 = vsel %vm29, %v112, 0
    %117 = vmatprep.subr.mxu0 %v115
    %118 = vmatpush1.msra.mxu0 %v113
    %119 = vmatprep.subr.mxu0 0.0
    %120 = vmatpush1.msra.mxu0 0.0
    %121 = vmatprep.subr.mxu0 0.0
    %122 = vmatpush1.msra.mxu0 0.0
    %123 = vmatprep.subr.mxu0 0.0
    %124 = vmatpush1.msra.mxu0 0.0
    %125 = vmatprep.subr.mxu0 0.0
    %126 = vmatpush1.msra.mxu0 0.0
    %127 = vmatprep.subr.mxu0 0.0
    %128 = vmatpush1.msra.mxu0 0.0
    %129 = vmatprep.subr.mxu0 0.0
    %130 = vmatpush1.msra.mxu0 0.0
    %131 = vmatprep.subr.mxu0 0.0
    %132 = vmatpush1.msra.mxu0 0.0
    %133 = vmatprep.subr.mxu0 0.0
    %134 = vmatpush1.msra.mxu0 0.0
    %135 = vmatprep.subr.mxu0 0.0
    %136 = vmatpush1.msra.mxu0 0.0
    %137 = vmatprep.subr.mxu0 0.0
    %138 = vmatpush1.msra.mxu0 0.0
    %139 = vmatprep.subr.mxu0 0.0
    %140 = vmatpush1.msra.mxu0 0.0
    %141 = vmatprep.subr.mxu0 0.0
    %142 = vmatpush1.msra.mxu0 0.0
    %143 = vmatprep.subr.mxu0 0.0
    %144 = vmatpush1.msra.mxu0 0.0
    %145 = vmatprep.subr.mxu0 0.0
    %146 = vmatpush1.msra.mxu0 0.0
    %147 = vmatprep.subr.mxu0 0.0
    %148 = vmatpush1.msra.mxu0 0.0
    %149 = vmatprep.subr.mxu0 0.0
    %150 = vmatpush1.msra.mxu0 0.0
    %151 = vmatprep.subr.mxu0 0.0
    %152 = vmatpush1.msra.mxu0 0.0
    %153 = vmatprep.subr.mxu0 0.0
    %154 = vmatpush1.msra.mxu0 0.0
    %155 = vmatprep.subr.mxu0 0.0
    %156 = vmatpush1.msra.mxu0 0.0
    %157 = vmatprep.subr.mxu0 0.0
    %158 = vmatpush1.msra.mxu0 0.0
    %159 = vmatprep.subr.mxu0 0.0
    %160 = vmatpush1.msra.mxu0 0.0
    %161 = vmatprep.subr.mxu0 0.0
    %162 = vmatpush1.msra.mxu0 0.0
    %163 = vmatprep.subr.mxu0 0.0
    %164 = vmatpush1.msra.mxu0 0.0
    %165 = vmatprep.subr.mxu0 0.0
    %166 = vmatpush1.msra.mxu0 0.0
    %167 = vmatprep.subr.mxu0 0.0
    %168 = vmatpush1.msra.mxu0 0.0
    %169 = vmatprep.subr.mxu0 0.0
    %170 = vmatpush1.msra.mxu0 0.0
    %171 = vmatprep.subr.mxu0 0.0
    %172 = vmatpush1.msra.mxu0 0.0
    %173 = vmatprep.subr.mxu0 0.0
    %174 = vmatpush1.msra.mxu0 0.0
    %175 = vmatprep.subr.mxu0 0.0
    %176 = vmatpush1.msra.mxu0 0.0
    %177 = vmatprep.subr.mxu0 0.0
    %178 = vmatpush1.msra.mxu0 0.0
    %179 = vmatprep.subr.mxu0 0.0
    %180 = vmatpush1.msra.mxu0 0.0
    %181 = vmatprep.mubr.f32.mxu0 0.0
    %182 = vmatmul.mubr.f32.gmra.mrb[0].mxu0 %v27
    %v183 = vpop.f32.mrb[0].mxu0
    %v184 = vadd.f32 %v21, %v183
    %v185 = vpop.f32.mrb[0].mxu0
    %v186 = vadd.f32 %v21, %v185
    %187 = vdwg.mxu0
    %v188 = vmax.f32 %v184, 0.0
    %v189 = vmax.f32 %v186, 0.0
    %s190 = scalar_lea.vmem [#allocation2], 16
    %191 = vst [vmem:[%s190] sm:$0xff] %v188
    %192 = vst [vmem:[%s190 + $0x8] sm:$0xff] %v189
    // Predicated region
    $region14: #{tpu_custom_call.1} parent=1 // pred_check
      _
    $region15: #{tpu_custom_call.1} parent=1 // pred_check_branch
      %194 = sbr.rel (0) target = $region17
    $region16: #{tpu_custom_call.1} parent=1 // pred_region
      %s196 = ssub.s32 512, 512
      %197 = vsyncadd [#allocation3], %s196
      %s198 = sshll.u32 [#allocation2], 4
      %s199 = int_to_ptr.vmem [resolvable:$true] %s198
      %204 = dma.vmem_to_hbm [thread:$0]  %s199, 512, %s3, [#allocation3], 256, 256, 16
    $region17: #{tpu_custom_call.1} parent=1 // pred_fallthru
      _
    // Predicated region
    $region18: #{tpu_custom_call.1} parent=1 // pred_check
      _
    $region19: #{tpu_custom_call.1} parent=1 // pred_check_branch
      %206 = sbr.rel (0) target = $region21
    $region20: #{tpu_custom_call.1} parent=1 // pred_region
      %207 = dma.done [#allocation3], 512
    $region21: #{tpu_custom_call.1} parent=1 // pred_fallthru
      _
    %208 = vsyncpa [#allocation3], 1

</llo_original>
